<compile_context>
chip_gen: v5e
topology: v5e:2x2
jax: 0.10.0
libtpu: 0.0.40
codegen_flags: <defaults>
</compile_context>

<pallas_src>
import functools

import jax
import jax.numpy as jnp
from jax.experimental import pallas as pl
from jax.experimental.pallas import tpu as pltpu


def _round_up(x: int, m: int) -> int:
    return (x + m - 1) // m * m


# -----------------------------------------------------------------------------
# Kernel body
# -----------------------------------------------------------------------------
def _mlp_kernel(x_ref, w1_ref, b1_ref, w2_ref, b2_ref, o_ref, h_ref):
    # x:  (B_pad, raw_dim) bf16       w1: (raw_dim, E_pad) bf16   b1: (1, E_pad) f32
    # w2: (E_pad,  tile_n) bf16       b2: (1, tile_n) f32
    # o:  (B_pad, tile_n)  bf16       h_ref: (B_pad, E_pad) bf16 scratch
    @pl.when(pl.program_id(0) == 0)
    def _():
        # First linear + SiLU, computed once and cached for all N-tiles.
        h = jnp.dot(x_ref[...], w1_ref[...], preferred_element_type=jnp.float32)
        h = h + b1_ref[...]
        h = h * jax.nn.sigmoid(h)          # SiLU: sigmoid -> EUP, mul -> VPU
        h_ref[...] = h.astype(h_ref.dtype)

    # Second linear against this grid step's N-tile of w2 (f32 MXU accumulation).
    out = jnp.dot(h_ref[...], w2_ref[...], preferred_element_type=jnp.float32)
    o_ref[...] = (out + b2_ref[...]).astype(o_ref.dtype)


# -----------------------------------------------------------------------------
# One-time parameter preparation (hoisted out of the per-call forward)
# -----------------------------------------------------------------------------
def prepare_params(params):
    """Pad embed_dim to a multiple of 128 lanes and cast weights to bf16 ONCE.

    The forward then feeds these pre-padded arrays straight to the Pallas call,
    so no per-call pad/cast re-reads the full E x E w2.
    """
    w1, b1, w2, b2 = params["w1"], params["b1"], params["w2"], params["b2"]
    embed_dim = w1.shape[1]
    E_pad = _round_up(embed_dim, 128)
    pe = E_pad - embed_dim
    return {
        "w1": jnp.pad(jnp.asarray(w1, jnp.float32), ((0, 0), (0, pe))).astype(jnp.bfloat16),
        "b1": jnp.pad(jnp.asarray(b1, jnp.float32), ((0, 0), (0, pe))),
        "w2": jnp.pad(jnp.asarray(w2, jnp.float32), ((0, pe), (0, pe))).astype(jnp.bfloat16),
        "b2": jnp.pad(jnp.asarray(b2, jnp.float32), ((0, 0), (0, pe))),
    }


# -----------------------------------------------------------------------------
# Forward
# -----------------------------------------------------------------------------
@functools.partial(jax.jit, static_argnames=("embed_dim", "is_fov"))
def camera_embedder_forward(R, T, focal_length, principal_point, prepared,
                            *, embed_dim, is_fov=False):
    """Concat / batch-pad in JAX, MLP hot path in Pallas.

    For multi-view inputs flatten views into the batch (B*V) before calling so
    the MXU M-dimension is amortized over more rows.
    """
    B = R.shape[0]
    if is_fov:
        # FoVPerspectiveCameras branch: zero focal/principal features
        # (matches the torch.zeros((B, 2)) in the original module).
        focal_length = jnp.zeros((B, 2), R.dtype)
        principal_point = jnp.zeros((B, 2), R.dtype)
    camera_emb = jnp.concatenate(
        [R.reshape(B, -1), T, focal_length, principal_point], axis=-1
    )  # (B, raw_dim)

    w1_p, b1_p = prepared["w1"], prepared["b1"]
    w2_p, b2_p = prepared["w2"], prepared["b2"]
    raw_dim = camera_emb.shape[-1]
    E_pad = w1_p.shape[1]

    # --- Batch padding: 16 rows (bf16 vregs pack (16,128) sublanes) -----------
    B_pad = _round_up(max(B, 1), 16)
    x_p = jnp.pad(camera_emb, ((0, B_pad - B), (0, 0))).astype(jnp.bfloat16)

    # --- Output-N tiling: sized for DMA/compute overlap (double-buffered w2) --
    if E_pad <= 512:
        tile_n = E_pad                    # one DMA, one step (v5e/v6e small-E case)
    elif E_pad % 512 == 0:
        tile_n = 512                      # 4 tiles at E=2048, 2 at E=1024
    elif E_pad % 256 == 0:
        tile_n = 256
    else:
        tile_n = 128
    n_tiles = E_pad // tile_n

    out = pl.pallas_call(
        _mlp_kernel,
        out_shape=jax.ShapeDtypeStruct((B_pad, E_pad), jnp.bfloat16),
        grid=(n_tiles,),
        in_specs=[
            pl.BlockSpec((B_pad, raw_dim), lambda j: (0, 0)),   # x   (resident)
            pl.BlockSpec((raw_dim, E_pad), lambda j: (0, 0)),   # w1  (resident)
            pl.BlockSpec((1, E_pad), lambda j: (0, 0)),         # b1  (resident)
            pl.BlockSpec((E_pad, tile_n), lambda j: (0, j)),    # w2  (N-tiled, pipelined)
            pl.BlockSpec((1, tile_n), lambda j: (0, j)),        # b2  (N-tiled)
        ],
        out_specs=pl.BlockSpec((B_pad, tile_n), lambda j: (0, j)),
        scratch_shapes=[pltpu.VMEM((B_pad, E_pad), jnp.bfloat16)],   # cached h
        compiler_params=pltpu.CompilerParams(
            # The h-scratch carries across N-tiles -> the axis is not parallel.
            dimension_semantics=("arbitrary",)
        ),
    )(x_p, w1_p, b1_p, w2_p, b2_p)

    return out[:B, :embed_dim]


# -----------------------------------------------------------------------------
# Params / reference
# -----------------------------------------------------------------------------
def init_params(key, raw_dim, embed_dim):
    """Deterministic synthetic params; weights stored as (in, out) = torch W^T."""
    k1, k2, k3, k4 = jax.random.split(key, 4)
    w1 = jax.random.normal(k1, (raw_dim, embed_dim), jnp.float32) * 0.02
    b1 = jax.random.normal(k2, (1, embed_dim), jnp.float32) * 0.01
    w2 = jax.random.normal(k3, (embed_dim, embed_dim), jnp.float32) * 0.02
    b2 = jax.random.normal(k4, (1, embed_dim), jnp.float32) * 0.01
    return {"w1": w1, "b1": b1, "w2": w2, "b2": b2}


def _reference_forward(R, T, focal_length, principal_point, params):
    """Plain-JAX reference mirroring the kernel's bf16-weight / f32-accum math."""
    B = R.shape[0]
    x = jnp.concatenate(
        [R.reshape(B, -1), T, focal_length, principal_point], axis=-1
    ).astype(jnp.bfloat16)
    w1 = params["w1"].astype(jnp.bfloat16)
    w2 = params["w2"].astype(jnp.bfloat16)
    h = jnp.dot(x, w1, preferred_element_type=jnp.float32) + params["b1"]
    h = (h * jax.nn.sigmoid(h)).astype(jnp.bfloat16)
    out = jnp.dot(h, w2, preferred_element_type=jnp.float32) + params["b2"]
    return out.astype(jnp.bfloat16)


# -----------------------------------------------------------------------------
# Self test
# -----------------------------------------------------------------------------
if __name__ == "__main__":
    B = 6            # deliberately not a multiple of 16 to exercise row padding
    raw_dim = 16     # 9 (R) + 3 (T) + 2 (focal) + 2 (principal)
    embed_dim = 32   # padded to 128 lanes inside prepare_params

    key = jax.random.PRNGKey(0)
    kR, kT, kf, kp, kparams = jax.random.split(key, 5)

    R = jax.random.normal(kR, (B, 3, 3), jnp.float32)
    T = jax.random.normal(kT, (B, 3), jnp.float32)
    focal_length = jax.random.normal(kf, (B, 2), jnp.float32)
    principal_point = jax.random.normal(kp, (B, 2), jnp.float32)

    params = init_params(kparams, raw_dim, embed_dim)
    prepared = prepare_params(params)          # one-time pad/cast, outside the hot path

    out = camera_embedder_forward(
        R, T, focal_length, principal_point, prepared, embed_dim=embed_dim
    )
    out = jax.block_until_ready(out)

    ref = _reference_forward(R, T, focal_length, principal_point, params)
    assert out.shape == (B, embed_dim)
    assert out.dtype == jnp.bfloat16
    # bf16 weights + f32 MXU accumulation: tolerance covers bf16 rounding drift
    # relative to the full-f32 PyTorch module.
    assert jnp.allclose(out.astype(jnp.float32), ref.astype(jnp.float32),
                        atol=1e-2, rtol=1e-2)

    print("KERNEL_OK")
</pallas_src>

<mosaic_0001>
module attributes {stable_mosaic.version = 11 : i64} {
  func.func @_mlp_kernel(%arg0: i32, %arg1: memref<16x16xbf16, #tpu.memory_space<vmem>>, %arg2: memref<16x128xbf16, #tpu.memory_space<vmem>>, %arg3: memref<1x128xf32, #tpu.memory_space<vmem>>, %arg4: memref<128x128xbf16, #tpu.memory_space<vmem>>, %arg5: memref<1x128xf32, #tpu.memory_space<vmem>>, %arg6: memref<16x128xbf16, #tpu.memory_space<vmem>>, %arg7: memref<16x128xbf16, #tpu.memory_space<vmem>>) attributes {dimension_semantics = [#tpu.dimension_semantics<arbitrary>], iteration_bounds = array<i64: 1>, scalar_prefetch = 0 : i64, scratch_operands = 1 : i64, tpu.core_type = #tpu.core_type<tc>, window_params = [{pipeline_mode = #tpu.pipeline_mode<synchronous>, transform_indices = @transform_0, window_bounds = array<i64: 16, 16>}, {pipeline_mode = #tpu.pipeline_mode<synchronous>, transform_indices = @transform_1, window_bounds = array<i64: 16, 128>}, {pipeline_mode = #tpu.pipeline_mode<synchronous>, transform_indices = @transform_2, window_bounds = array<i64: 1, 128>}, {transform_indices = @transform_3, window_bounds = array<i64: 128, 128>}, {transform_indices = @transform_4, window_bounds = array<i64: 1, 128>}, {transform_indices = @transform_5, window_bounds = array<i64: 16, 128>}]} {
    %c0_i32 = arith.constant 0 : i32
    %0 = arith.cmpi eq, %arg0, %c0_i32 : i32
    %1 = arith.extui %0 : i1 to i32
    %c0_i32_0 = arith.constant 0 : i32
    %2 = arith.cmpi ne, %1, %c0_i32_0 : i32
    scf.if %2 {
      %c0_8 = arith.constant 0 : index
      %c0_9 = arith.constant 0 : index
      %11 = vector.load %arg1[%c0_8, %c0_9] : memref<16x16xbf16, #tpu.memory_space<vmem>>, vector<16x16xbf16>
      %c0_10 = arith.constant 0 : index
      %c0_11 = arith.constant 0 : index
      %12 = vector.load %arg2[%c0_10, %c0_11] : memref<16x128xbf16, #tpu.memory_space<vmem>>, vector<16x128xbf16>
      %cst_12 = arith.constant dense<0.000000e+00> : vector<16x128xf32>
      %13 = tpu.matmul %11, %12, %cst_12 {dimension_numbers = #tpu.dot_dimension_numbers<[1], [0], [0], [1], [0, 0, 1, 1], [], []>} : vector<16x16xbf16>, vector<16x128xbf16>, vector<16x128xf32> -> vector<16x128xf32>
      %c0_13 = arith.constant 0 : index
      %c0_14 = arith.constant 0 : index
      %14 = vector.load %arg3[%c0_13, %c0_14] : memref<1x128xf32, #tpu.memory_space<vmem>>, vector<1x128xf32>
      %15 = vector.broadcast %14 : vector<1x128xf32> to vector<16x128xf32>
      %16 = arith.addf %13, %15 : vector<16x128xf32>
      %17 = arith.negf %16 : vector<16x128xf32>
      %18 = math.exp %17 : vector<16x128xf32>
      %cst_15 = arith.constant 1.000000e+00 : f32
      %19 = vector.broadcast %cst_15 : f32 to vector<16x128xf32>
      %20 = arith.addf %19, %18 : vector<16x128xf32>
      %21 = arith.divf %19, %20 : vector<16x128xf32>
      %22 = arith.mulf %16, %21 : vector<16x128xf32>
      %23 = arith.truncf %22 : vector<16x128xf32> to vector<16x128xbf16>
      %c0_16 = arith.constant 0 : index
      %c0_17 = arith.constant 0 : index
      %24 = vector.load %arg7[%c0_16, %c0_17] : memref<16x128xbf16, #tpu.memory_space<vmem>>, vector<16x128xbf16>
      tpu.vector_store %arg7[%c0_16, %c0_17], %23 {strides = array<i32>} : memref<16x128xbf16, #tpu.memory_space<vmem>>, vector<16x128xbf16>,
    } else {
    }
    %c0 = arith.constant 0 : index
    %c0_1 = arith.constant 0 : index
    %3 = vector.load %arg7[%c0, %c0_1] : memref<16x128xbf16, #tpu.memory_space<vmem>>, vector<16x128xbf16>
    %c0_2 = arith.constant 0 : index
    %c0_3 = arith.constant 0 : index
    %4 = vector.load %arg4[%c0_2, %c0_3] : memref<128x128xbf16, #tpu.memory_space<vmem>>, vector<128x128xbf16>
    %cst = arith.constant dense<0.000000e+00> : vector<16x128xf32>
    %5 = tpu.matmul %3, %4, %cst {dimension_numbers = #tpu.dot_dimension_numbers<[1], [0], [0], [1], [0, 0, 1, 1], [], []>} : vector<16x128xbf16>, vector<128x128xbf16>, vector<16x128xf32> -> vector<16x128xf32>
    %c0_4 = arith.constant 0 : index
    %c0_5 = arith.constant 0 : index
    %6 = vector.load %arg5[%c0_4, %c0_5] : memref<1x128xf32, #tpu.memory_space<vmem>>, vector<1x128xf32>
    %7 = vector.broadcast %6 : vector<1x128xf32> to vector<16x128xf32>
    %8 = arith.addf %5, %7 : vector<16x128xf32>
    %9 = arith.truncf %8 : vector<16x128xf32> to vector<16x128xbf16>
    %c0_6 = arith.constant 0 : index
    %c0_7 = arith.constant 0 : index
    %10 = vector.load %arg6[%c0_6, %c0_7] : memref<16x128xbf16, #tpu.memory_space<vmem>>, vector<16x128xbf16>
    tpu.vector_store %arg6[%c0_6, %c0_7], %9 {strides = array<i32>} : memref<16x128xbf16, #tpu.memory_space<vmem>>, vector<16x128xbf16>,
    return
  }
  func.func @transform_0(%arg0: i32) -> (i32, i32) {
    %c0_i32 = arith.constant 0 : i32
    %c0_i32_0 = arith.constant 0 : i32
    %c0_i32_1 = arith.constant 0 : i32
    return %c0_i32, %c0_i32_0 : i32, i32
  }
  func.func @transform_1(%arg0: i32) -> (i32, i32) {
    %c0_i32 = arith.constant 0 : i32
    %c0_i32_0 = arith.constant 0 : i32
    %c0_i32_1 = arith.constant 0 : i32
    return %c0_i32, %c0_i32_0 : i32, i32
  }
  func.func @transform_2(%arg0: i32) -> (i32, i32) {
    %c0_i32 = arith.constant 0 : i32
    %c0_i32_0 = arith.constant 0 : i32
    %c0_i32_1 = arith.constant 0 : i32
    return %c0_i32, %c0_i32_0 : i32, i32
  }
  func.func @transform_3(%arg0: i32) -> (i32, i32) {
    %c0_i32 = arith.constant 0 : i32
    %c0_i32_0 = arith.constant 0 : i32
    return %c0_i32, %arg0 : i32, i32
  }
  func.func @transform_4(%arg0: i32) -> (i32, i32) {
    %c0_i32 = arith.constant 0 : i32
    %c0_i32_0 = arith.constant 0 : i32
    return %c0_i32, %arg0 : i32, i32
  }
  func.func @transform_5(%arg0: i32) -> (i32, i32) {
    %c0_i32 = arith.constant 0 : i32
    %c0_i32_0 = arith.constant 0 : i32
    return %c0_i32, %arg0 : i32, i32
  }
}

</mosaic_0001>

<llo_original>
// kernel: camera_embedder_forward.1
$region0: #{camera_embedder_forward.1}
  #allocation0 [shape = 'u32[]', space=smem, size = 0x4, offset = 0x4, fixed_abs, tag = 'smem constant byte address 0x4 - core index']
  #allocation1 [shape = 'u32[72,128]{1,0:T(1,128)}', space=vmem, size = 0x9000, scoped, tag = 'internal scratch']
  #allocation2 [shape = 'bf16[16,128]{1,0:T(8,128)(2,1)}', space=vmem, size = 0x1000, scoped, tag = 'scratch operand']
  %s0 = inlined_call_operand.vmem [shape: bf16[16,16], index: 0, kind: input, shape index: {}]
  %s1 = inlined_call_operand.vmem [shape: bf16[16,128], index: 1, kind: input, shape index: {}]
  %s2 = inlined_call_operand.vmem [shape: f32[1,128], index: 2, kind: input, shape index: {}]
  %s3 = inlined_call_operand.hbm [shape: bf16[128,128], index: 3, kind: input, shape index: {}]
  %s4 = inlined_call_operand.vmem [shape: f32[1,128], index: 4, kind: input, shape index: {}]
  %s5 = inlined_call_operand.vmem [shape: bf16[16,128], index: 5, kind: output, shape index: {}]
  %s6 = sld [smem:[#allocation0]]
  $region38: #{camera_embedder_forward.1} parent=0
    _
  %s8 = ssub.s32 1, %s6
  %s9 = scalar_select 0, %s8, %s6
  $region1: #{camera_embedder_forward.1} parent=0
    #allocation3 [shape = 'u8[32768]{0}', space=vmem, size = 0x8000, scoped, tag = 'input window, operand 3, single buffered']
    #allocation4 [shape = 's32[1]{0}', space=sflag, size = 0x4, scoped, tag = 'scoped memory for camera_embedder_forward.1']
    %10 = vsyncpa [#allocation4], 0
    // Predicated region
    $region2: #{camera_embedder_forward.1} parent=1 // pred_check
      _
    $region3: #{camera_embedder_forward.1} parent=1 // pred_check_branch
      %12 = sbr.rel (0) target = $region5
    $region4: #{camera_embedder_forward.1} parent=1 // pred_region
      _
    $region5: #{camera_embedder_forward.1} parent=1 // pred_fallthru
      _
    // Predicated region
    $region6: #{camera_embedder_forward.1} parent=1 // pred_check
      _
    $region7: #{camera_embedder_forward.1} parent=1 // pred_check_branch
      %14 = sbr.rel (0) target = $region9
    $region8: #{camera_embedder_forward.1} parent=1 // pred_region
      _
    $region9: #{camera_embedder_forward.1} parent=1 // pred_fallthru
      _
    // Predicated region
    $region10: #{camera_embedder_forward.1} parent=1 // pred_check
      _
    $region11: #{camera_embedder_forward.1} parent=1 // pred_check_branch
      %16 = sbr.rel (0) target = $region13
    $region12: #{camera_embedder_forward.1} parent=1 // pred_region
      _
    $region13: #{camera_embedder_forward.1} parent=1 // pred_fallthru
      _
    // Predicated region
    $region14: #{camera_embedder_forward.1} parent=1 // pred_check
      _
    $region15: #{camera_embedder_forward.1} parent=1 // pred_check_branch
      %18 = sbr.rel (0) target = $region17
    $region16: #{camera_embedder_forward.1} parent=1 // pred_region
      %20 = vsyncadd [#allocation4], 0
      %s21 = sshll.u32 %s3, 4
      %s22 = int_to_ptr.hbm [resolvable:$true] %s21
      %s23 = sshll.u32 [#allocation3], 4
      %s24 = int_to_ptr.vmem [resolvable:$true] %s23
      %29 = dma.hbm_to_vmem [thread:$0]  %s22, 1024, %s24, [#allocation4], 64, 64, 4
    $region17: #{camera_embedder_forward.1} parent=1 // pred_fallthru
      _
    // Predicated region
    $region18: #{camera_embedder_forward.1} parent=1 // pred_check
      _
    $region19: #{camera_embedder_forward.1} parent=1 // pred_check_branch
      %31 = sbr.rel (0) target = $region21
    $region20: #{camera_embedder_forward.1} parent=1 // pred_region
      _
    $region21: #{camera_embedder_forward.1} parent=1 // pred_fallthru
      _
    // Predicated region
    $region22: #{camera_embedder_forward.1} parent=1 // pred_check
      _
    $region23: #{camera_embedder_forward.1} parent=1 // pred_check_branch
      %33 = sbr.rel (0) target = $region25
    $region24: #{camera_embedder_forward.1} parent=1 // pred_region
      %35 = dma.done [#allocation4], 1024
    $region25: #{camera_embedder_forward.1} parent=1 // pred_fallthru
      _
    %p37 = scmp.eq.s32.totalorder 0, 0
    // Predicated region
    $region26: #{camera_embedder_forward.1} parent=1 // pred_check
      %p38 = pneg %p37
    $region27: #{camera_embedder_forward.1} parent=1 // pred_check_branch
      %40 = sbr.rel (%p38) target = $region29
    $region28: #{camera_embedder_forward.1} parent=1 // pred_region
      %v41 = vld [vmem:[%s0] sm:$0xf]
      %v42 = vld [vmem:[%s0 + $0x4] sm:$0xf]
      %v43 = vld [vmem:[%s1] sm:$0xf]
      %v44 = vld [vmem:[%s1 + $0x4] sm:$0xf]
      %v45 = vld [vmem:[%s2] sm:$0x1]
      %v47 = vperm.slane %v45, 0
      %v51 = vunpack.c.l.b16 %v41
      %v52 = vunpack.c.l.b16 %v42
      %v53 = vpack.c.b16 %v52, %v51
      %v56 = vunpack.c.l.b16 %v43
      %v57 = vunpack.c.l.b16 %v44
      %v58 = vpack.c.b16 %v57, %v56
      %vm60 = vcmask 130048
      %v62 = vsel %vm60, %v53, 0
      %64 = vmatpush.bf16.msra.mxu0 0
      %65 = vmatpush.bf16.msra.mxu0 0
      %66 = vmatpush.bf16.msra.mxu0 0
      %67 = vmatpush.bf16.msra.mxu0 0
      %68 = vmatpush.bf16.msra.mxu0 0
      %69 = vmatpush.bf16.msra.mxu0 0
      %70 = vmatpush.bf16.msra.mxu0 0
      %71 = vmatpush.bf16.msra.mxu0 %v58
      %72 = vmatmul.bf16.gmra.mxu0 %v62
      %v73 = vpop.f32.mrf.mxu0
      %v74 = vadd.f32 %v47, %v73
      %v75 = vpop.f32.mrf.mxu0
      %v76 = vadd.f32 %v47, %v75
      %77 = vdwg.mxu0
      %v78 = vxor.u32 %v74, 2147483648
      %v79 = vxor.u32 %v76, 2147483648
      %v80 = vmul.f32 %v78, 1.442695
      %v81 = vpow.pop %v80
      %v82 = vmul.f32 %v79, 1.442695
      %v83 = vpow.pop %v82
      %v84 = vadd.f32 %v81, 1.0
      %v85 = vadd.f32 %v83, 1.0
      %v86 = vrcp.pop %v84
      %v87 = vmul.f32 %v84, %v86
      %v88 = vsub.f32 1.0, %v87
      %v89 = vmul.f32 %v86, %v88
      %v90 = vadd.f32 %v86, %v89
      %vm91 = vweird.f32 %v84
      %vm92 = vweird.f32 %v86
      %vm93 = vmor %vm91, %vm92
      %v94 = vsel %vm93, %v86, %v90
      %v95 = vand.u32 2147483647, %v84
      %vm96 = vcmp.eq.f32.partialorder %v95, 8.507059e+37
      %v97 = vand.u32 %v84, 2147483648
      %v98 = vor.u32 1.1754944e-38, %v97
      %v99 = vsel %vm96, %v98, %v94
      %v100 = vmul.f32 1.0, %v99
      %v101 = vrcp.pop %v85
      %v102 = vmul.f32 %v85, %v101
      %v103 = vsub.f32 1.0, %v102
      %v104 = vmul.f32 %v101, %v103
      %v105 = vadd.f32 %v101, %v104
      %vm106 = vweird.f32 %v85
      %vm107 = vweird.f32 %v101
      %vm108 = vmor %vm106, %vm107
      %v109 = vsel %vm108, %v101, %v105
      %v110 = vand.u32 2147483647, %v85
      %vm111 = vcmp.eq.f32.partialorder %v110, 8.507059e+37
      %v112 = vand.u32 %v85, 2147483648
      %v113 = vor.u32 1.1754944e-38, %v112
      %v114 = vsel %vm111, %v113, %v109
      %v115 = vmul.f32 1.0, %v114
      %v116 = vmul.f32 %v74, %v100
      %v117 = vmul.f32 %v76, %v115
      %v118 = vpack.c.bf16 %v116, %v116
      %v119 = vpack.c.bf16 %v117, %v117
      %120 = vst [vmem:[#allocation2] sm:$0xf] %v118
      %121 = vst [vmem:[#allocation2 + $0x4] sm:$0xf] %v119
    $region29: #{camera_embedder_forward.1} parent=1 // pred_fallthru
      _
    %v122 = vld [vmem:[#allocation2] sm:$0xf]
    %v123 = vld [vmem:[#allocation2 + $0x4] sm:$0xf]
    %v124 = vld [vmem:[#allocation3] sm:$0xf]
    %v125 = vld [vmem:[#allocation3 + $0x4] sm:$0xf]
    %v126 = vld [vmem:[#allocation3 + $0x8] sm:$0xf]
    %v127 = vld [vmem:[#allocation3 + $0xc] sm:$0xf]
    %v128 = vld [vmem:[#allocation3 + $0x10] sm:$0xf]
    %v129 = vld [vmem:[#allocation3 + $0x14] sm:$0xf]
    %v130 = vld [vmem:[#allocation3 + $0x18] sm:$0xf]
    %v131 = vld [vmem:[#allocation3 + $0x1c] sm:$0xf]
    %v132 = vld [vmem:[#allocation3 + $0x20] sm:$0xf]
    %v133 = vld [vmem:[#allocation3 + $0x24] sm:$0xf]
    %v134 = vld [vmem:[#allocation3 + $0x28] sm:$0xf]
    %v135 = vld [vmem:[#allocation3 + $0x2c] sm:$0xf]
    %v136 = vld [vmem:[#allocation3 + $0x30] sm:$0xf]
    %v137 = vld [vmem:[#allocation3 + $0x34] sm:$0xf]
    %v138 = vld [vmem:[#allocation3 + $0x38] sm:$0xf]
    %v139 = vld [vmem:[#allocation3 + $0x3c] sm:$0xf]
    %v140 = vld [vmem:[%s4] sm:$0x1]
    %v142 = vperm.slane %v140, 0
    %v146 = vunpack.c.l.b16 %v122
    %v147 = vunpack.c.l.b16 %v123
    %v148 = vpack.c.b16 %v147, %v146
    %v166 = vunpack.c.l.b16 %v124
    %v167 = vunpack.c.l.b16 %v125
    %v168 = vunpack.c.l.b16 %v126
    %v169 = vunpack.c.l.b16 %v127
    %v170 = vunpack.c.l.b16 %v128
    %v171 = vunpack.c.l.b16 %v129
    %v172 = vunpack.c.l.b16 %v130
    %v173 = vunpack.c.l.b16 %v131
    %v174 = vunpack.c.l.b16 %v132
    %v175 = vunpack.c.l.b16 %v133
    %v176 = vunpack.c.l.b16 %v134
    %v177 = vunpack.c.l.b16 %v135
    %v178 = vunpack.c.l.b16 %v136
    %v179 = vunpack.c.l.b16 %v137
    %v180 = vunpack.c.l.b16 %v138
    %v181 = vunpack.c.l.b16 %v139
    %v182 = vpack.c.b16 %v167, %v166
    %v183 = vpack.c.b16 %v169, %v168
    %v184 = vpack.c.b16 %v171, %v170
    %v185 = vpack.c.b16 %v173, %v172
    %v186 = vpack.c.b16 %v175, %v174
    %v187 = vpack.c.b16 %v177, %v176
    %v188 = vpack.c.b16 %v179, %v178
    %v189 = vpack.c.b16 %v181, %v180
    %198 = vmatpush.bf16.msra.mxu0 %v189
    %199 = vmatpush.bf16.msra.mxu0 %v188
    %200 = vmatpush.bf16.msra.mxu0 %v187
    %201 = vmatpush.bf16.msra.mxu0 %v186
    %202 = vmatpush.bf16.msra.mxu0 %v185
    %203 = vmatpush.bf16.msra.mxu0 %v184
    %204 = vmatpush.bf16.msra.mxu0 %v183
    %205 = vmatpush.bf16.msra.mxu0 %v182
    %206 = vmatmul.bf16.gmra.mxu0 %v148
    %v207 = vpop.f32.mrf.mxu0
    %v208 = vadd.f32 %v142, %v207
    %v209 = vpop.f32.mrf.mxu0
    %v210 = vadd.f32 %v142, %v209
    %211 = vdwg.mxu0
    %v212 = vpack.c.bf16 %v208, %v208
    %v213 = vpack.c.bf16 %v210, %v210
    %214 = vst [vmem:[%s5] sm:$0xf] %v212
    %215 = vst [vmem:[%s5 + $0x4] sm:$0xf] %v213
    // Predicated region
    $region30: #{camera_embedder_forward.1} parent=1 // pred_check
      _
    $region31: #{camera_embedder_forward.1} parent=1 // pred_check_branch
      %217 = sbr.rel (0) target = $region33
    $region32: #{camera_embedder_forward.1} parent=1 // pred_region
      _
    $region33: #{camera_embedder_forward.1} parent=1 // pred_fallthru
      _
    // Predicated region
    $region34: #{camera_embedder_forward.1} parent=1 // pred_check
      _
    $region35: #{camera_embedder_forward.1} parent=1 // pred_check_branch
      %219 = sbr.rel (0) target = $region37
    $region36: #{camera_embedder_forward.1} parent=1 // pred_region
      _
    $region37: #{camera_embedder_forward.1} parent=1 // pred_fallthru
      _
    %220 = vsyncpa [#allocation4], 1

</llo_original>
